<compile_context>
chip_gen: v5e
topology: v5e:2x2
jax: 0.10.0
libtpu: 0.0.40
codegen_flags: <defaults>
</compile_context>

<pallas_src>
import jax
import jax.numpy as jnp
from jax import lax
from jax.experimental import pallas as pl
from jax.experimental.pallas import tpu as pltpu  # noqa: F401  (kept for TPU backend parity)

C_IN = 1232
C_OUT = 308


def conv1x1_relu_kernel(x_ref, w_ref, b_ref, o_ref):
    # x_ref: (M, K) bf16   w_ref: (N, K) bf16   b_ref: (1, N) f32   o_ref: (M, N) f32
    y = lax.dot_general(
        x_ref[...], w_ref[...],
        dimension_numbers=(((1,), (1,)), ((), ())),   # contract K with K ("trans_b")
        preferred_element_type=jnp.float32,
    )
    y = y + b_ref[...]                                # bias broadcast over rows
    o_ref[...] = jnp.maximum(y, 0.0).astype(o_ref.dtype)


def conv1x1_relu(x_nchw, weight, bias):
    """x_nchw: (N, C_in, H, W); weight: (C_out, C_in, 1, 1); bias: (C_out,)."""
    n, c_in, h, w = x_nchw.shape
    c_out = weight.shape[0]
    assert c_in == weight.shape[1]

    # NCHW -> (N*H*W, C_in) pixel-row matrix. For H=W=1 this is a pure reshape.
    x2d = jnp.transpose(x_nchw, (0, 2, 3, 1)).reshape(n * h * w, c_in)
    m = x2d.shape[0]

    # bf16 operands (f32 accumulation on the MXU) — halves HBM bytes streamed.
    x2d = x2d.astype(jnp.bfloat16)
    w2d = weight.reshape(c_out, c_in).astype(jnp.bfloat16)   # NOT transposed
    b2d = bias.reshape(1, c_out).astype(jnp.float32)

    out = pl.pallas_call(
        conv1x1_relu_kernel,
        out_shape=jax.ShapeDtypeStruct((m, c_out), jnp.float32),
        in_specs=[
            pl.BlockSpec((m, c_in), lambda: (0, 0)),
            pl.BlockSpec((c_out, c_in), lambda: (0, 0)),
            pl.BlockSpec((1, c_out), lambda: (0, 0)),
        ],
        out_specs=pl.BlockSpec((m, c_out), lambda: (0, 0)),
    )(x2d, w2d, b2d)

    # (N*H*W, C_out) -> NCHW
    return jnp.transpose(out.reshape(n, h, w, c_out), (0, 3, 1, 2))


if __name__ == "__main__":
    key = jax.random.PRNGKey(0)
    kx, kw, kb = jax.random.split(key, 3)

    # Shapes implied by the module's forward: x192 = (1, 1232, 1, 1)
    x = jax.random.normal(kx, (1, C_IN, 1, 1), dtype=jnp.float32)

    # PyTorch-style uniform(-1/sqrt(fan_in), 1/sqrt(fan_in)) init
    bound = 1.0 / (C_IN ** 0.5)
    weight = jax.random.uniform(kw, (C_OUT, C_IN, 1, 1), jnp.float32, -bound, bound)
    bias = jax.random.uniform(kb, (C_OUT,), jnp.float32, -bound, bound)

    y = conv1x1_relu(x, weight, bias)
    jax.block_until_ready(y)

    # Reference with the same bf16 input quantization (f32 accumulate), so
    # only summation-order differences remain.
    x_q = x.astype(jnp.bfloat16).astype(jnp.float32)
    w_q = weight.reshape(C_OUT, C_IN).astype(jnp.bfloat16).astype(jnp.float32)
    ref = jnp.maximum(
        jnp.einsum("nchw,oc->nohw", x_q, w_q) + bias.reshape(1, C_OUT, 1, 1),
        0.0,
    )

    assert y.shape == (1, C_OUT, 1, 1)
    assert jnp.allclose(y, ref, atol=5e-3, rtol=5e-3)

    print("KERNEL_OK")
</pallas_src>

<mosaic_0001>
module attributes {stable_mosaic.version = 11 : i64} {
  func.func @conv1x1_relu_kernel(%arg0: memref<1x1232xbf16, #tpu.memory_space<vmem>>, %arg1: memref<308x1232xbf16, #tpu.memory_space<vmem>>, %arg2: memref<1x308xf32, #tpu.memory_space<vmem>>, %arg3: memref<1x308xf32, #tpu.memory_space<vmem>>) attributes {dimension_semantics = [], scalar_prefetch = 0 : i64, scratch_operands = 0 : i64, tpu.core_type = #tpu.core_type<tc>} {
    %c0 = arith.constant 0 : index
    %c0_0 = arith.constant 0 : index
    %0 = vector.load %arg0[%c0, %c0_0] : memref<1x1232xbf16, #tpu.memory_space<vmem>>, vector<1x1232xbf16>
    %c0_1 = arith.constant 0 : index
    %c0_2 = arith.constant 0 : index
    %1 = vector.load %arg1[%c0_1, %c0_2] : memref<308x1232xbf16, #tpu.memory_space<vmem>>, vector<308x1232xbf16>
    %cst = arith.constant dense<0.000000e+00> : vector<1x308xf32>
    %2 = tpu.matmul %0, %1, %cst {dimension_numbers = #tpu.dot_dimension_numbers<[1], [1], [0], [0], [0, 0, 1, 0], [], []>} : vector<1x1232xbf16>, vector<308x1232xbf16>, vector<1x308xf32> -> vector<1x308xf32>
    %c0_3 = arith.constant 0 : index
    %c0_4 = arith.constant 0 : index
    %3 = vector.load %arg2[%c0_3, %c0_4] : memref<1x308xf32, #tpu.memory_space<vmem>>, vector<1x308xf32>
    %4 = arith.addf %2, %3 : vector<1x308xf32>
    %cst_5 = arith.constant 0.000000e+00 : f32
    %5 = vector.broadcast %cst_5 : f32 to vector<1x308xf32>
    %6 = arith.maximumf %4, %5 : vector<1x308xf32>
    %c0_6 = arith.constant 0 : index
    %c0_7 = arith.constant 0 : index
    %7 = vector.load %arg3[%c0_6, %c0_7] : memref<1x308xf32, #tpu.memory_space<vmem>>, vector<1x308xf32>
    tpu.vector_store %arg3[%c0_6, %c0_7], %6 {strides = array<i32>} : memref<1x308xf32, #tpu.memory_space<vmem>>, vector<1x308xf32>,
    return
  }
}

</mosaic_0001>

<llo_original>
// kernel: tpu_custom_call.1
$region0: #{tpu_custom_call.1}
  #allocation0 [shape = 'u32[]', space=smem, size = 0x4, offset = 0x4, fixed_abs, tag = 'smem constant byte address 0x4 - core index']
  #allocation1 [shape = 'u32[72,128]{1,0:T(1,128)}', space=vmem, size = 0x9000, scoped, tag = 'internal scratch']
  %s0 = inlined_call_operand.hbm [shape: bf16[1,1232], index: 0, kind: input, shape index: {}]
  %s1 = inlined_call_operand.hbm [shape: bf16[308,1232], index: 1, kind: input, shape index: {}]
  %s2 = inlined_call_operand.hbm [shape: f32[1,308], index: 2, kind: input, shape index: {}]
  %s3 = inlined_call_operand.hbm [shape: f32[1,308], index: 3, kind: output, shape index: {}]
  %s4 = sld [smem:[#allocation0]]
  $region34: #{tpu_custom_call.1} parent=0
    _
  %s6 = ssub.s32 1, %s4
  %s7 = scalar_select 0, %s6, %s4
  $region1: #{tpu_custom_call.1} parent=0
    #allocation2 [shape = 'u8[5120]{0}', space=vmem, size = 0x1400, scoped, tag = 'input window, operand 0, single buffered']
    #allocation3 [shape = 's32[1]{0}', space=sflag, size = 0x4, scoped, tag = 'scoped memory for tpu_custom_call.1']
    #allocation4 [shape = 's32[1]{0}', space=sflag, size = 0x4, scoped, tag = 'scoped memory for tpu_custom_call.1']
    #allocation5 [shape = 'u8[798720]{0}', space=vmem, size = 0xc3000, scoped, tag = 'input window, operand 1, single buffered']
    #allocation6 [shape = 's32[1]{0}', space=sflag, size = 0x4, scoped, tag = 'scoped memory for tpu_custom_call.1']
    #allocation7 [shape = 'u8[1536]{0}', space=vmem, size = 0x800, scoped, tag = 'input window, operand 2, single buffered']
    #allocation8 [shape = 'u8[1536]{0}', space=vmem, size = 0x800, scoped, tag = 'output window, operand 0, single buffered']
    %8 = vsyncpa [#allocation3], 0
    %9 = vsyncpa [#allocation6], 0
    %10 = vsyncpa [#allocation4], 0
    // Predicated region
    $region2: #{tpu_custom_call.1} parent=1 // pred_check
      _
    $region3: #{tpu_custom_call.1} parent=1 // pred_check_branch
      %12 = sbr.rel (0) target = $region5
    $region4: #{tpu_custom_call.1} parent=1 // pred_region
      %14 = vsyncadd [#allocation3], 0
      %s16 = sshll.u32 %s0, 4
      %s17 = int_to_ptr.hbm [resolvable:$true] %s16
      %s18 = sshll.u32 [#allocation2], 4
      %s19 = int_to_ptr.vmem [resolvable:$true] %s18
      %21 = dma.hbm_to_vmem [thread:$0]  %s17, 160, %s19, [#allocation3]
    $region5: #{tpu_custom_call.1} parent=1 // pred_fallthru
      _
    // Predicated region
    $region6: #{tpu_custom_call.1} parent=1 // pred_check
      _
    $region7: #{tpu_custom_call.1} parent=1 // pred_check_branch
      %23 = sbr.rel (0) target = $region9
    $region8: #{tpu_custom_call.1} parent=1 // pred_region
      %25 = vsyncadd [#allocation6], 0
      %s26 = sshll.u32 %s1, 4
      %s27 = int_to_ptr.hbm [resolvable:$true] %s26
      %s28 = sshll.u32 [#allocation5], 4
      %s29 = int_to_ptr.vmem [resolvable:$true] %s28
      %34 = dma.hbm_to_vmem [thread:$0]  %s27, 24960, %s29, [#allocation6], 640, 640, 40
    $region9: #{tpu_custom_call.1} parent=1 // pred_fallthru
      _
    // Predicated region
    $region10: #{tpu_custom_call.1} parent=1 // pred_check
      _
    $region11: #{tpu_custom_call.1} parent=1 // pred_check_branch
      %36 = sbr.rel (0) target = $region13
    $region12: #{tpu_custom_call.1} parent=1 // pred_region
      %38 = vsyncadd [#allocation6], 0
      %s40 = sshll.u32 %s2, 4
      %s41 = int_to_ptr.hbm [resolvable:$true] %s40
      %s42 = sshll.u32 [#allocation7], 4
      %s43 = int_to_ptr.vmem [resolvable:$true] %s42
      %45 = dma.hbm_to_vmem [thread:$0]  %s41, 48, %s43, [#allocation6]
    $region13: #{tpu_custom_call.1} parent=1 // pred_fallthru
      _
    // Predicated region
    $region14: #{tpu_custom_call.1} parent=1 // pred_check
      _
    $region15: #{tpu_custom_call.1} parent=1 // pred_check_branch
      %47 = sbr.rel (0) target = $region17
    $region16: #{tpu_custom_call.1} parent=1 // pred_region
      %49 = dma.done [#allocation3], 160
    $region17: #{tpu_custom_call.1} parent=1 // pred_fallthru
      _
    // Predicated region
    $region18: #{tpu_custom_call.1} parent=1 // pred_check
      _
    $region19: #{tpu_custom_call.1} parent=1 // pred_check_branch
      %51 = sbr.rel (0) target = $region21
    $region20: #{tpu_custom_call.1} parent=1 // pred_region
      %53 = dma.done [#allocation6], 24960
    $region21: #{tpu_custom_call.1} parent=1 // pred_fallthru
      _
    // Predicated region
    $region22: #{tpu_custom_call.1} parent=1 // pred_check
      _
    $region23: #{tpu_custom_call.1} parent=1 // pred_check_branch
      %55 = sbr.rel (0) target = $region25
    $region24: #{tpu_custom_call.1} parent=1 // pred_region
      %57 = dma.done [#allocation6], 48
    $region25: #{tpu_custom_call.1} parent=1 // pred_fallthru
      _
    %v59 = vld [vmem:[#allocation2] sm:$0xff]
    %v60 = vld [vmem:[#allocation2 + $0x8] sm:$0x3]
    %v61 = vld [vmem:[#allocation5] sm:$0xff]
    %v62 = vld [vmem:[#allocation5 + $0x8] sm:$0xff]
    %v63 = vld [vmem:[#allocation5 + $0x10] sm:$0xff]
    %v64 = vld [vmem:[#allocation5 + $0x18] sm:$0xff]
    %v65 = vld [vmem:[#allocation5 + $0x20] sm:$0xff]
    %v66 = vld [vmem:[#allocation5 + $0x28] sm:$0xff]
    %v67 = vld [vmem:[#allocation5 + $0x30] sm:$0xff]
    %v68 = vld [vmem:[#allocation5 + $0x38] sm:$0xff]
    %v69 = vld [vmem:[#allocation5 + $0x40] sm:$0xff]
    %v70 = vld [vmem:[#allocation5 + $0x48] sm:$0xff]
    %v71 = vld [vmem:[#allocation5 + $0x50] sm:$0xff]
    %v72 = vld [vmem:[#allocation5 + $0x58] sm:$0xff]
    %v73 = vld [vmem:[#allocation5 + $0x60] sm:$0xff]
    %v74 = vld [vmem:[#allocation5 + $0x68] sm:$0xff]
    %v75 = vld [vmem:[#allocation5 + $0x70] sm:$0xff]
    %v76 = vld [vmem:[#allocation5 + $0x78] sm:$0xff]
    %v77 = vld [vmem:[#allocation5 + $0x80] sm:$0xff]
    %v78 = vld [vmem:[#allocation5 + $0x88] sm:$0xff]
    %v79 = vld [vmem:[#allocation5 + $0x90] sm:$0xff]
    %v80 = vld [vmem:[#allocation5 + $0x98] sm:$0xff]
    %v81 = vld [vmem:[#allocation5 + $0xa0] sm:$0xff]
    %v82 = vld [vmem:[#allocation5 + $0xa8] sm:$0xff]
    %v83 = vld [vmem:[#allocation5 + $0xb0] sm:$0xff]
    %v84 = vld [vmem:[#allocation5 + $0xb8] sm:$0xff]
    %v85 = vld [vmem:[#allocation5 + $0xc0] sm:$0xff]
    %v86 = vld [vmem:[#allocation5 + $0xc8] sm:$0xff]
    %v87 = vld [vmem:[#allocation5 + $0xd0] sm:$0xff]
    %v88 = vld [vmem:[#allocation5 + $0xd8] sm:$0xff]
    %v89 = vld [vmem:[#allocation5 + $0xe0] sm:$0xff]
    %v90 = vld [vmem:[#allocation5 + $0xe8] sm:$0xff]
    %v91 = vld [vmem:[#allocation5 + $0xf0] sm:$0xff]
    %v92 = vld [vmem:[#allocation5 + $0xf8] sm:$0xff]
    %v93 = vld [vmem:[#allocation5 + $0x100] sm:$0xff]
    %v94 = vld [vmem:[#allocation5 + $0x108] sm:$0xff]
    %v95 = vld [vmem:[#allocation5 + $0x110] sm:$0xff]
    %v96 = vld [vmem:[#allocation5 + $0x118] sm:$0xff]
    %v97 = vld [vmem:[#allocation5 + $0x120] sm:$0xff]
    %v98 = vld [vmem:[#allocation5 + $0x128] sm:$0xff]
    %v99 = vld [vmem:[#allocation5 + $0x130] sm:$0xff]
    %v100 = vld [vmem:[#allocation5 + $0x138] sm:$0xff]
    %v101 = vld [vmem:[#allocation5 + $0x140] sm:$0xff]
    %v102 = vld [vmem:[#allocation5 + $0x148] sm:$0xff]
    %v103 = vld [vmem:[#allocation5 + $0x150] sm:$0xff]
    %v104 = vld [vmem:[#allocation5 + $0x158] sm:$0xff]
    %v105 = vld [vmem:[#allocation5 + $0x160] sm:$0xff]
    %v106 = vld [vmem:[#allocation5 + $0x168] sm:$0xff]
    %v107 = vld [vmem:[#allocation5 + $0x170] sm:$0xff]
    %v108 = vld [vmem:[#allocation5 + $0x178] sm:$0xff]
    %v109 = vld [vmem:[#allocation5 + $0x180] sm:$0xff]
    %v110 = vld [vmem:[#allocation5 + $0x188] sm:$0xff]
    %v111 = vld [vmem:[#allocation5 + $0x190] sm:$0xff]
    %v112 = vld [vmem:[#allocation5 + $0x198] sm:$0xff]
    %v113 = vld [vmem:[#allocation5 + $0x1a0] sm:$0xff]
    %v114 = vld [vmem:[#allocation5 + $0x1a8] sm:$0xff]
    %v115 = vld [vmem:[#allocation5 + $0x1b0] sm:$0xff]
    %v116 = vld [vmem:[#allocation5 + $0x1b8] sm:$0xff]
    %v117 = vld [vmem:[#allocation5 + $0x1c0] sm:$0xff]
    %v118 = vld [vmem:[#allocation5 + $0x1c8] sm:$0xff]
    %v119 = vld [vmem:[#allocation5 + $0x1d0] sm:$0xff]
    %v120 = vld [vmem:[#allocation5 + $0x1d8] sm:$0xff]
    %v121 = vld [vmem:[#allocation5 + $0x1e0] sm:$0xff]
    %v122 = vld [vmem:[#allocation5 + $0x1e8] sm:$0xff]
    %v123 = vld [vmem:[#allocation5 + $0x1f0] sm:$0xff]
    %v124 = vld [vmem:[#allocation5 + $0x1f8] sm:$0xff]
    %v125 = vld [vmem:[#allocation5 + $0x200] sm:$0xff]
    %v126 = vld [vmem:[#allocation5 + $0x208] sm:$0xff]
    %v127 = vld [vmem:[#allocation5 + $0x210] sm:$0xff]
    %v128 = vld [vmem:[#allocation5 + $0x218] sm:$0xff]
    %v129 = vld [vmem:[#allocation5 + $0x220] sm:$0xff]
    %v130 = vld [vmem:[#allocation5 + $0x228] sm:$0xff]
    %v131 = vld [vmem:[#allocation5 + $0x230] sm:$0xff]
    %v132 = vld [vmem:[#allocation5 + $0x238] sm:$0xff]
    %v133 = vld [vmem:[#allocation5 + $0x240] sm:$0xff]
    %v134 = vld [vmem:[#allocation5 + $0x248] sm:$0xff]
    %v135 = vld [vmem:[#allocation5 + $0x250] sm:$0xff]
    %v136 = vld [vmem:[#allocation5 + $0x258] sm:$0xff]
    %v137 = vld [vmem:[#allocation5 + $0x260] sm:$0xff]
    %v138 = vld [vmem:[#allocation5 + $0x268] sm:$0xff]
    %v139 = vld [vmem:[#allocation5 + $0x270] sm:$0xff]
    %v140 = vld [vmem:[#allocation5 + $0x278] sm:$0xff]
    %v141 = vld [vmem:[#allocation5 + $0x280] sm:$0xff]
    %v142 = vld [vmem:[#allocation5 + $0x288] sm:$0xff]
    %v143 = vld [vmem:[#allocation5 + $0x290] sm:$0xff]
    %v144 = vld [vmem:[#allocation5 + $0x298] sm:$0xff]
    %v145 = vld [vmem:[#allocation5 + $0x2a0] sm:$0xff]
    %v146 = vld [vmem:[#allocation5 + $0x2a8] sm:$0xff]
    %v147 = vld [vmem:[#allocation5 + $0x2b0] sm:$0xff]
    %v148 = vld [vmem:[#allocation5 + $0x2b8] sm:$0xff]
    %v149 = vld [vmem:[#allocation5 + $0x2c0] sm:$0xff]
    %v150 = vld [vmem:[#allocation5 + $0x2c8] sm:$0xff]
    %v151 = vld [vmem:[#allocation5 + $0x2d0] sm:$0xff]
    %v152 = vld [vmem:[#allocation5 + $0x2d8] sm:$0xff]
    %v153 = vld [vmem:[#allocation5 + $0x2e0] sm:$0xff]
    %v154 = vld [vmem:[#allocation5 + $0x2e8] sm:$0xff]
    %v155 = vld [vmem:[#allocation5 + $0x2f0] sm:$0xff]
    %v156 = vld [vmem:[#allocation5 + $0x2f8] sm:$0xff]
    %v157 = vld [vmem:[#allocation5 + $0x300] sm:$0xff]
    %v158 = vld [vmem:[#allocation5 + $0x308] sm:$0xff]
    %v159 = vld [vmem:[#allocation5 + $0x310] sm:$0xff]
    %v160 = vld [vmem:[#allocation5 + $0x318] sm:$0xff]
    %v161 = vld [vmem:[#allocation5 + $0x320] sm:$0xff]
    %v162 = vld [vmem:[#allocation5 + $0x328] sm:$0xff]
    %v163 = vld [vmem:[#allocation5 + $0x330] sm:$0xff]
    %v164 = vld [vmem:[#allocation5 + $0x338] sm:$0xff]
    %v165 = vld [vmem:[#allocation5 + $0x340] sm:$0xff]
    %v166 = vld [vmem:[#allocation5 + $0x348] sm:$0xff]
    %v167 = vld [vmem:[#allocation5 + $0x350] sm:$0xff]
    %v168 = vld [vmem:[#allocation5 + $0x358] sm:$0xff]
    %v169 = vld [vmem:[#allocation5 + $0x360] sm:$0xff]
    %v170 = vld [vmem:[#allocation5 + $0x368] sm:$0xff]
    %v171 = vld [vmem:[#allocation5 + $0x370] sm:$0xff]
    %v172 = vld [vmem:[#allocation5 + $0x378] sm:$0xff]
    %v173 = vld [vmem:[#allocation5 + $0x380] sm:$0xff]
    %v174 = vld [vmem:[#allocation5 + $0x388] sm:$0xff]
    %v175 = vld [vmem:[#allocation5 + $0x390] sm:$0xff]
    %v176 = vld [vmem:[#allocation5 + $0x398] sm:$0xff]
    %v177 = vld [vmem:[#allocation5 + $0x3a0] sm:$0xff]
    %v178 = vld [vmem:[#allocation5 + $0x3a8] sm:$0xff]
    %v179 = vld [vmem:[#allocation5 + $0x3b0] sm:$0xff]
    %v180 = vld [vmem:[#allocation5 + $0x3b8] sm:$0xff]
    %v181 = vld [vmem:[#allocation5 + $0x3c0] sm:$0xff]
    %v182 = vld [vmem:[#allocation5 + $0x3c8] sm:$0xff]
    %v183 = vld [vmem:[#allocation5 + $0x3d0] sm:$0xff]
    %v184 = vld [vmem:[#allocation5 + $0x3d8] sm:$0xff]
    %v185 = vld [vmem:[#allocation5 + $0x3e0] sm:$0xff]
    %v186 = vld [vmem:[#allocation5 + $0x3e8] sm:$0xff]
    %v187 = vld [vmem:[#allocation5 + $0x3f0] sm:$0xff]
    %v188 = vld [vmem:[#allocation5 + $0x3f8] sm:$0xff]
    %v189 = vld [vmem:[#allocation5 + $0x400] sm:$0xff]
    %v190 = vld [vmem:[#allocation5 + $0x408] sm:$0xff]
    %v191 = vld [vmem:[#allocation5 + $0x410] sm:$0xff]
    %v192 = vld [vmem:[#allocation5 + $0x418] sm:$0xff]
    %v193 = vld [vmem:[#allocation5 + $0x420] sm:$0xff]
    %v194 = vld [vmem:[#allocation5 + $0x428] sm:$0xff]
    %v195 = vld [vmem:[#allocation5 + $0x430] sm:$0xff]
    %v196 = vld [vmem:[#allocation5 + $0x438] sm:$0xff]
    %v197 = vld [vmem:[#allocation5 + $0x440] sm:$0xff]
    %v198 = vld [vmem:[#allocation5 + $0x448] sm:$0xff]
    %v199 = vld [vmem:[#allocation5 + $0x450] sm:$0xff]
    %v200 = vld [vmem:[#allocation5 + $0x458] sm:$0xff]
    %v201 = vld [vmem:[#allocation5 + $0x460] sm:$0xff]
    %v202 = vld [vmem:[#allocation5 + $0x468] sm:$0xff]
    %v203 = vld [vmem:[#allocation5 + $0x470] sm:$0xff]
    %v204 = vld [vmem:[#allocation5 + $0x478] sm:$0xff]
    %v205 = vld [vmem:[#allocation5 + $0x480] sm:$0xff]
    %v206 = vld [vmem:[#allocation5 + $0x488] sm:$0xff]
    %v207 = vld [vmem:[#allocation5 + $0x490] sm:$0xff]
    %v208 = vld [vmem:[#allocation5 + $0x498] sm:$0xff]
    %v209 = vld [vmem:[#allocation5 + $0x4a0] sm:$0xff]
    %v210 = vld [vmem:[#allocation5 + $0x4a8] sm:$0xff]
    %v211 = vld [vmem:[#allocation5 + $0x4b0] sm:$0xff]
    %v212 = vld [vmem:[#allocation5 + $0x4b8] sm:$0xff]
    %v213 = vld [vmem:[#allocation5 + $0x4c0] sm:$0xff]
    %v214 = vld [vmem:[#allocation5 + $0x4c8] sm:$0xff]
    %v215 = vld [vmem:[#allocation5 + $0x4d0] sm:$0xff]
    %v216 = vld [vmem:[#allocation5 + $0x4d8] sm:$0xff]
    %v217 = vld [vmem:[#allocation5 + $0x4e0] sm:$0xff]
    %v218 = vld [vmem:[#allocation5 + $0x4e8] sm:$0xff]
    %v219 = vld [vmem:[#allocation5 + $0x4f0] sm:$0xff]
    %v220 = vld [vmem:[#allocation5 + $0x4f8] sm:$0xff]
    %v221 = vld [vmem:[#allocation5 + $0x500] sm:$0xff]
    %v222 = vld [vmem:[#allocation5 + $0x508] sm:$0xff]
    %v223 = vld [vmem:[#allocation5 + $0x510] sm:$0xff]
    %v224 = vld [vmem:[#allocation5 + $0x518] sm:$0xff]
    %v225 = vld [vmem:[#allocation5 + $0x520] sm:$0xff]
    %v226 = vld [vmem:[#allocation5 + $0x528] sm:$0xff]
    %v227 = vld [vmem:[#allocation5 + $0x530] sm:$0xff]
    %v228 = vld [vmem:[#allocation5 + $0x538] sm:$0xff]
    %v229 = vld [vmem:[#allocation5 + $0x540] sm:$0xff]
    %v230 = vld [vmem:[#allocation5 + $0x548] sm:$0xff]
    %v231 = vld [vmem:[#allocation5 + $0x550] sm:$0xff]
    %v232 = vld [vmem:[#allocation5 + $0x558] sm:$0xff]
    %v233 = vld [vmem:[#allocation5 + $0x560] sm:$0xff]
    %v234 = vld [vmem:[#allocation5 + $0x568] sm:$0xff]
    %v235 = vld [vmem:[#allocation5 + $0x570] sm:$0xff]
    %v236 = vld [vmem:[#allocation5 + $0x578] sm:$0xff]
    %v237 = vld [vmem:[#allocation5 + $0x580] sm:$0xff]
    %v238 = vld [vmem:[#allocation5 + $0x588] sm:$0xff]
    %v239 = vld [vmem:[#allocation5 + $0x590] sm:$0xff]
    %v240 = vld [vmem:[#allocation5 + $0x598] sm:$0xff]
    %v241 = vld [vmem:[#allocation5 + $0x5a0] sm:$0xff]
    %v242 = vld [vmem:[#allocation5 + $0x5a8] sm:$0xff]
    %v243 = vld [vmem:[#allocation5 + $0x5b0] sm:$0xff]
    %v244 = vld [vmem:[#allocation5 + $0x5b8] sm:$0xff]
    %v245 = vld [vmem:[#allocation5 + $0x5c0] sm:$0xff]
    %v246 = vld [vmem:[#allocation5 + $0x5c8] sm:$0xff]
    %v247 = vld [vmem:[#allocation5 + $0x5d0] sm:$0xff]
    %v248 = vld [vmem:[#allocation5 + $0x5d8] sm:$0xff]
    %v249 = vld [vmem:[#allocation5 + $0x5e0] sm:$0xff]
    %v250 = vld [vmem:[#allocation5 + $0x5e8] sm:$0xff]
    %v251 = vld [vmem:[#allocation5 + $0x5f0] sm:$0x33]
    %v252 = vld [vmem:[#allocation5 + $0x5f8] sm:$0x33]
    %v253 = vld [vmem:[#allocation5 + $0x600] sm:$0x33]
    %v254 = vld [vmem:[#allocation5 + $0x608] sm:$0x33]
    %v255 = vld [vmem:[#allocation5 + $0x610] sm:$0x33]
    %v256 = vld [vmem:[#allocation7] sm:$0x7]
    %258 = vst [vmem:[#allocation1] ss:$9 sm:$0xff] %v59
    %v259 = vld [vmem:[#allocation1] sm:$0xff]
    %v260 = vld [vmem:[#allocation1 + $0x9] sm:$0xff]
    %v261 = vld [vmem:[#allocation1 + $0x12] sm:$0xff]
    %v262 = vld [vmem:[#allocation1 + $0x1b] sm:$0xff]
    %v263 = vld [vmem:[#allocation1 + $0x24] sm:$0xff]
    %v264 = vld [vmem:[#allocation1 + $0x2d] sm:$0xff]
    %v265 = vld [vmem:[#allocation1 + $0x36] sm:$0xff]
    %v266 = vld [vmem:[#allocation1 + $0x3f] sm:$0xff]
    %268 = vst [vmem:[#allocation1] ss:$9 sm:$0xff] %v60
    %v269 = vld [vmem:[#allocation1] sm:$0xff]
    %v270 = vld [vmem:[#allocation1 + $0x9] sm:$0xff]
    %v475 = vunpack.c.l.b16 %v61
    %v476 = vunpack.c.h.b16 %v61
    %v477 = vunpack.c.l.b16 %v62
    %v478 = vunpack.c.h.b16 %v62
    %v479 = vunpack.c.l.b16 %v63
    %v480 = vunpack.c.h.b16 %v63
    %v481 = vunpack.c.l.b16 %v64
    %v482 = vunpack.c.h.b16 %v64
    %v483 = vunpack.c.l.b16 %v65
    %v484 = vunpack.c.h.b16 %v65
    %v485 = vunpack.c.l.b16 %v66
    %v486 = vunpack.c.h.b16 %v66
    %v487 = vunpack.c.l.b16 %v67
    %v488 = vunpack.c.h.b16 %v67
    %v489 = vunpack.c.l.b16 %v68
    %v490 = vunpack.c.h.b16 %v68
    %v491 = vunpack.c.l.b16 %v69
    %v492 = vunpack.c.h.b16 %v69
    %v493 = vunpack.c.l.b16 %v70
    %v494 = vunpack.c.h.b16 %v70
    %v495 = vunpack.c.l.b16 %v71
    %v496 = vunpack.c.h.b16 %v71
    %v497 = vunpack.c.l.b16 %v72
    %v498 = vunpack.c.h.b16 %v72
    %v499 = vunpack.c.l.b16 %v73
    %v500 = vunpack.c.h.b16 %v73
    %v501 = vunpack.c.l.b16 %v74
    %v502 = vunpack.c.h.b16 %v74
    %v503 = vunpack.c.l.b16 %v75
    %v504 = vunpack.c.h.b16 %v75
    %v505 = vunpack.c.l.b16 %v76
    %v506 = vunpack.c.h.b16 %v76
    %v507 = vunpack.c.l.b16 %v77
    %v508 = vunpack.c.h.b16 %v77
    %v509 = vunpack.c.l.b16 %v78
    %v510 = vunpack.c.h.b16 %v78
    %v511 = vunpack.c.l.b16 %v79
    %v512 = vunpack.c.h.b16 %v79
    %v513 = vunpack.c.l.b16 %v80
    %v514 = vunpack.c.h.b16 %v80
    %v515 = vunpack.c.l.b16 %v81
    %v516 = vunpack.c.h.b16 %v81
    %v517 = vunpack.c.l.b16 %v82
    %v518 = vunpack.c.h.b16 %v82
    %v519 = vunpack.c.l.b16 %v83
    %v520 = vunpack.c.h.b16 %v83
    %v521 = vunpack.c.l.b16 %v84
    %v522 = vunpack.c.h.b16 %v84
    %v523 = vunpack.c.l.b16 %v85
    %v524 = vunpack.c.h.b16 %v85
    %v525 = vunpack.c.l.b16 %v86
    %v526 = vunpack.c.h.b16 %v86
    %v527 = vunpack.c.l.b16 %v87
    %v528 = vunpack.c.h.b16 %v87
    %v529 = vunpack.c.l.b16 %v88
    %v530 = vunpack.c.h.b16 %v88
    %v531 = vunpack.c.l.b16 %v89
    %v532 = vunpack.c.h.b16 %v89
    %v533 = vunpack.c.l.b16 %v90
    %v534 = vunpack.c.h.b16 %v90
    %v535 = vunpack.c.l.b16 %v91
    %v536 = vunpack.c.h.b16 %v91
    %v537 = vunpack.c.l.b16 %v92
    %v538 = vunpack.c.h.b16 %v92
    %v539 = vunpack.c.l.b16 %v93
    %v540 = vunpack.c.h.b16 %v93
    %v541 = vunpack.c.l.b16 %v94
    %v542 = vunpack.c.h.b16 %v94
    %v543 = vunpack.c.l.b16 %v95
    %v544 = vunpack.c.h.b16 %v95
    %v545 = vunpack.c.l.b16 %v96
    %v546 = vunpack.c.h.b16 %v96
    %v547 = vunpack.c.l.b16 %v97
    %v548 = vunpack.c.h.b16 %v97
    %v549 = vunpack.c.l.b16 %v98
    %v550 = vunpack.c.h.b16 %v98
    %v551 = vunpack.c.l.b16 %v99
    %v552 = vunpack.c.h.b16 %v99
    %v553 = vunpack.c.l.b16 %v100
    %v554 = vunpack.c.h.b16 %v100
    %v555 = vunpack.c.l.b16 %v101
    %v556 = vunpack.c.h.b16 %v101
    %v557 = vunpack.c.l.b16 %v102
    %v558 = vunpack.c.h.b16 %v102
    %v559 = vunpack.c.l.b16 %v103
    %v560 = vunpack.c.h.b16 %v103
    %v561 = vunpack.c.l.b16 %v104
    %v562 = vunpack.c.h.b16 %v104
    %v563 = vunpack.c.l.b16 %v105
    %v564 = vunpack.c.h.b16 %v105
    %v565 = vunpack.c.l.b16 %v106
    %v566 = vunpack.c.h.b16 %v106
    %v567 = vunpack.c.l.b16 %v107
    %v568 = vunpack.c.h.b16 %v107
    %v569 = vunpack.c.l.b16 %v108
    %v570 = vunpack.c.h.b16 %v108
    %v571 = vunpack.c.l.b16 %v109
    %v572 = vunpack.c.h.b16 %v109
    %v573 = vunpack.c.l.b16 %v110
    %v574 = vunpack.c.h.b16 %v110
    %v575 = vunpack.c.l.b16 %v111
    %v576 = vunpack.c.h.b16 %v111
    %v577 = vunpack.c.l.b16 %v112
    %v578 = vunpack.c.h.b16 %v112
    %v579 = vunpack.c.l.b16 %v113
    %v580 = vunpack.c.h.b16 %v113
    %v581 = vunpack.c.l.b16 %v114
    %v582 = vunpack.c.h.b16 %v114
    %v583 = vunpack.c.l.b16 %v115
    %v584 = vunpack.c.h.b16 %v115
    %v585 = vunpack.c.l.b16 %v116
    %v586 = vunpack.c.h.b16 %v116
    %v587 = vunpack.c.l.b16 %v117
    %v588 = vunpack.c.h.b16 %v117
    %v589 = vunpack.c.l.b16 %v118
    %v590 = vunpack.c.h.b16 %v118
    %v591 = vunpack.c.l.b16 %v119
    %v592 = vunpack.c.h.b16 %v119
    %v593 = vunpack.c.l.b16 %v120
    %v594 = vunpack.c.h.b16 %v120
    %v595 = vunpack.c.l.b16 %v121
    %v596 = vunpack.c.h.b16 %v121
    %v597 = vunpack.c.l.b16 %v122
    %v598 = vunpack.c.h.b16 %v122
    %v599 = vunpack.c.l.b16 %v123
    %v600 = vunpack.c.h.b16 %v123
    %v601 = vunpack.c.l.b16 %v124
    %v602 = vunpack.c.h.b16 %v124
    %v603 = vunpack.c.l.b16 %v125
    %v604 = vunpack.c.h.b16 %v125
    %v605 = vunpack.c.l.b16 %v126
    %v606 = vunpack.c.h.b16 %v126
    %v607 = vunpack.c.l.b16 %v127
    %v608 = vunpack.c.h.b16 %v127
    %v609 = vunpack.c.l.b16 %v128
    %v610 = vunpack.c.h.b16 %v128
    %v611 = vunpack.c.l.b16 %v129
    %v612 = vunpack.c.h.b16 %v129
    %v613 = vunpack.c.l.b16 %v130
    %v614 = vunpack.c.h.b16 %v130
    %v615 = vunpack.c.l.b16 %v131
    %v616 = vunpack.c.h.b16 %v131
    %v617 = vunpack.c.l.b16 %v132
    %v618 = vunpack.c.h.b16 %v132
    %v619 = vunpack.c.l.b16 %v133
    %v620 = vunpack.c.h.b16 %v133
    %v621 = vunpack.c.l.b16 %v134
    %v622 = vunpack.c.h.b16 %v134
    %v623 = vunpack.c.l.b16 %v135
    %v624 = vunpack.c.h.b16 %v135
    %v625 = vunpack.c.l.b16 %v136
    %v626 = vunpack.c.h.b16 %v136
    %v627 = vunpack.c.l.b16 %v137
    %v628 = vunpack.c.h.b16 %v137
    %v629 = vunpack.c.l.b16 %v138
    %v630 = vunpack.c.h.b16 %v138
    %v631 = vunpack.c.l.b16 %v139
    %v632 = vunpack.c.h.b16 %v139
    %v633 = vunpack.c.l.b16 %v140
    %v634 = vunpack.c.h.b16 %v140
    %v635 = vunpack.c.l.b16 %v141
    %v636 = vunpack.c.h.b16 %v141
    %v637 = vunpack.c.l.b16 %v142
    %v638 = vunpack.c.h.b16 %v142
    %v639 = vunpack.c.l.b16 %v143
    %v640 = vunpack.c.h.b16 %v143
    %v641 = vunpack.c.l.b16 %v144
    %v642 = vunpack.c.h.b16 %v144
    %v643 = vunpack.c.l.b16 %v145
    %v644 = vunpack.c.h.b16 %v145
    %v645 = vunpack.c.l.b16 %v146
    %v646 = vunpack.c.h.b16 %v146
    %v647 = vunpack.c.l.b16 %v147
    %v648 = vunpack.c.h.b16 %v147
    %v649 = vunpack.c.l.b16 %v148
    %v650 = vunpack.c.h.b16 %v148
    %v651 = vunpack.c.l.b16 %v149
    %v652 = vunpack.c.h.b16 %v149
    %v653 = vunpack.c.l.b16 %v150
    %v654 = vunpack.c.h.b16 %v150
    %v655 = vunpack.c.l.b16 %v151
    %v656 = vunpack.c.h.b16 %v151
    %v657 = vunpack.c.l.b16 %v152
    %v658 = vunpack.c.h.b16 %v152
    %v659 = vunpack.c.l.b16 %v153
    %v660 = vunpack.c.h.b16 %v153
    %v661 = vunpack.c.l.b16 %v154
    %v662 = vunpack.c.h.b16 %v154
    %v663 = vunpack.c.l.b16 %v155
    %v664 = vunpack.c.h.b16 %v155
    %v665 = vunpack.c.l.b16 %v156
    %v666 = vunpack.c.h.b16 %v156
    %v667 = vunpack.c.l.b16 %v157
    %v668 = vunpack.c.h.b16 %v157
    %v669 = vunpack.c.l.b16 %v158
    %v670 = vunpack.c.h.b16 %v158
    %v671 = vunpack.c.l.b16 %v159
    %v672 = vunpack.c.h.b16 %v159
    %v673 = vunpack.c.l.b16 %v160
    %v674 = vunpack.c.h.b16 %v160
    %v675 = vunpack.c.l.b16 %v161
    %v676 = vunpack.c.h.b16 %v161
    %v677 = vunpack.c.l.b16 %v162
    %v678 = vunpack.c.h.b16 %v162
    %v679 = vunpack.c.l.b16 %v163
    %v680 = vunpack.c.h.b16 %v163
    %v681 = vunpack.c.l.b16 %v164
    %v682 = vunpack.c.h.b16 %v164
    %v683 = vunpack.c.l.b16 %v165
    %v684 = vunpack.c.h.b16 %v165
    %v685 = vunpack.c.l.b16 %v166
    %v686 = vunpack.c.h.b16 %v166
    %v687 = vunpack.c.l.b16 %v167
    %v688 = vunpack.c.h.b16 %v167
    %v689 = vunpack.c.l.b16 %v168
    %v690 = vunpack.c.h.b16 %v168
    %v691 = vunpack.c.l.b16 %v169
    %v692 = vunpack.c.h.b16 %v169
    %v693 = vunpack.c.l.b16 %v170
    %v694 = vunpack.c.h.b16 %v170
    %v695 = vunpack.c.l.b16 %v171
    %v696 = vunpack.c.h.b16 %v171
    %v697 = vunpack.c.l.b16 %v172
    %v698 = vunpack.c.h.b16 %v172
    %v699 = vunpack.c.l.b16 %v173
    %v700 = vunpack.c.h.b16 %v173
    %v701 = vunpack.c.l.b16 %v174
    %v702 = vunpack.c.h.b16 %v174
    %v703 = vunpack.c.l.b16 %v175
    %v704 = vunpack.c.h.b16 %v175
    %v705 = vunpack.c.l.b16 %v176
    %v706 = vunpack.c.h.b16 %v176
    %v707 = vunpack.c.l.b16 %v177
    %v708 = vunpack.c.h.b16 %v177
    %v709 = vunpack.c.l.b16 %v178
    %v710 = vunpack.c.h.b16 %v178
    %v711 = vunpack.c.l.b16 %v179
    %v712 = vunpack.c.h.b16 %v179
    %v713 = vunpack.c.l.b16 %v180
    %v714 = vunpack.c.h.b16 %v180
    %v715 = vunpack.c.l.b16 %v181
    %v716 = vunpack.c.h.b16 %v181
    %v717 = vunpack.c.l.b16 %v182
    %v718 = vunpack.c.h.b16 %v182
    %v719 = vunpack.c.l.b16 %v183
    %v720 = vunpack.c.h.b16 %v183
    %v721 = vunpack.c.l.b16 %v184
    %v722 = vunpack.c.h.b16 %v184
    %v723 = vunpack.c.l.b16 %v185
    %v724 = vunpack.c.h.b16 %v185
    %v725 = vunpack.c.l.b16 %v186
    %v726 = vunpack.c.h.b16 %v186
    %v727 = vunpack.c.l.b16 %v187
    %v728 = vunpack.c.h.b16 %v187
    %v729 = vunpack.c.l.b16 %v188
    %v730 = vunpack.c.h.b16 %v188
    %v731 = vunpack.c.l.b16 %v189
    %v732 = vunpack.c.h.b16 %v189
    %v733 = vunpack.c.l.b16 %v190
    %v734 = vunpack.c.h.b16 %v190
    %v735 = vunpack.c.l.b16 %v191
    %v736 = vunpack.c.h.b16 %v191
    %v737 = vunpack.c.l.b16 %v192
    %v738 = vunpack.c.h.b16 %v192
    %v739 = vunpack.c.l.b16 %v193
    %v740 = vunpack.c.h.b16 %v193
    %v741 = vunpack.c.l.b16 %v194
    %v742 = vunpack.c.h.b16 %v194
    %v743 = vunpack.c.l.b16 %v195
    %v744 = vunpack.c.h.b16 %v195
    %v745 = vunpack.c.l.b16 %v196
    %v746 = vunpack.c.h.b16 %v196
    %v747 = vunpack.c.l.b16 %v197
    %v748 = vunpack.c.h.b16 %v197
    %v749 = vunpack.c.l.b16 %v198
    %v750 = vunpack.c.h.b16 %v198
    %v751 = vunpack.c.l.b16 %v199
    %v752 = vunpack.c.h.b16 %v199
    %v753 = vunpack.c.l.b16 %v200
    %v754 = vunpack.c.h.b16 %v200
    %v755 = vunpack.c.l.b16 %v201
    %v756 = vunpack.c.h.b16 %v201
    %v757 = vunpack.c.l.b16 %v202
    %v758 = vunpack.c.h.b16 %v202
    %v759 = vunpack.c.l.b16 %v203
    %v760 = vunpack.c.h.b16 %v203
    %v761 = vunpack.c.l.b16 %v204
    %v762 = vunpack.c.h.b16 %v204
    %v763 = vunpack.c.l.b16 %v205
    %v764 = vunpack.c.h.b16 %v205
    %v765 = vunpack.c.l.b16 %v206
    %v766 = vunpack.c.h.b16 %v206
    %v767 = vunpack.c.l.b16 %v207
    %v768 = vunpack.c.h.b16 %v207
    %v769 = vunpack.c.l.b16 %v208
    %v770 = vunpack.c.h.b16 %v208
    %v771 = vunpack.c.l.b16 %v209
    %v772 = vunpack.c.h.b16 %v209
    %v773 = vunpack.c.l.b16 %v210
    %v774 = vunpack.c.h.b16 %v210
    %v775 = vunpack.c.l.b16 %v211
    %v776 = vunpack.c.h.b16 %v211
    %v777 = vunpack.c.l.b16 %v212
    %v778 = vunpack.c.h.b16 %v212
    %v779 = vunpack.c.l.b16 %v213
    %v780 = vunpack.c.h.b16 %v213
    %v781 = vunpack.c.l.b16 %v214
    %v782 = vunpack.c.h.b16 %v214
    %v783 = vunpack.c.l.b16 %v215
    %v784 = vunpack.c.h.b16 %v215
    %v785 = vunpack.c.l.b16 %v216
    %v786 = vunpack.c.h.b16 %v216
    %v787 = vunpack.c.l.b16 %v217
    %v788 = vunpack.c.h.b16 %v217
    %v789 = vunpack.c.l.b16 %v218
    %v790 = vunpack.c.h.b16 %v218
    %v791 = vunpack.c.l.b16 %v219
    %v792 = vunpack.c.h.b16 %v219
    %v793 = vunpack.c.l.b16 %v220
    %v794 = vunpack.c.h.b16 %v220
    %v795 = vunpack.c.l.b16 %v221
    %v796 = vunpack.c.h.b16 %v221
    %v797 = vunpack.c.l.b16 %v222
    %v798 = vunpack.c.h.b16 %v222
    %v799 = vunpack.c.l.b16 %v223
    %v800 = vunpack.c.h.b16 %v223
    %v801 = vunpack.c.l.b16 %v224
    %v802 = vunpack.c.h.b16 %v224
    %v803 = vunpack.c.l.b16 %v225
    %v804 = vunpack.c.h.b16 %v225
    %v805 = vunpack.c.l.b16 %v226
    %v806 = vunpack.c.h.b16 %v226
    %v807 = vunpack.c.l.b16 %v227
    %v808 = vunpack.c.h.b16 %v227
    %v809 = vunpack.c.l.b16 %v228
    %v810 = vunpack.c.h.b16 %v228
    %v811 = vunpack.c.l.b16 %v229
    %v812 = vunpack.c.h.b16 %v229
    %v813 = vunpack.c.l.b16 %v230
    %v814 = vunpack.c.h.b16 %v230
    %v815 = vunpack.c.l.b16 %v231
    %v816 = vunpack.c.h.b16 %v231
    %v817 = vunpack.c.l.b16 %v232
    %v818 = vunpack.c.h.b16 %v232
    %v819 = vunpack.c.l.b16 %v233
    %v820 = vunpack.c.h.b16 %v233
    %v821 = vunpack.c.l.b16 %v234
    %v822 = vunpack.c.h.b16 %v234
    %v823 = vunpack.c.l.b16 %v235
    %v824 = vunpack.c.h.b16 %v235
    %v825 = vunpack.c.l.b16 %v236
    %v826 = vunpack.c.h.b16 %v236
    %v827 = vunpack.c.l.b16 %v237
    %v828 = vunpack.c.h.b16 %v237
    %v829 = vunpack.c.l.b16 %v238
    %v830 = vunpack.c.h.b16 %v238
    %v831 = vunpack.c.l.b16 %v239
    %v832 = vunpack.c.h.b16 %v239
    %v833 = vunpack.c.l.b16 %v240
    %v834 = vunpack.c.h.b16 %v240
    %v835 = vunpack.c.l.b16 %v241
    %v836 = vunpack.c.h.b16 %v241
    %v837 = vunpack.c.l.b16 %v242
    %v838 = vunpack.c.h.b16 %v242
    %v839 = vunpack.c.l.b16 %v243
    %v840 = vunpack.c.h.b16 %v243
    %v841 = vunpack.c.l.b16 %v244
    %v842 = vunpack.c.h.b16 %v244
    %v843 = vunpack.c.l.b16 %v245
    %v844 = vunpack.c.h.b16 %v245
    %v845 = vunpack.c.l.b16 %v246
    %v846 = vunpack.c.h.b16 %v246
    %v847 = vunpack.c.l.b16 %v247
    %v848 = vunpack.c.h.b16 %v247
    %v849 = vunpack.c.l.b16 %v248
    %v850 = vunpack.c.h.b16 %v248
    %v851 = vunpack.c.l.b16 %v249
    %v852 = vunpack.c.h.b16 %v249
    %v853 = vunpack.c.l.b16 %v250
    %v854 = vunpack.c.h.b16 %v250
    %v855 = vunpack.c.l.b16 %v251
    %v856 = vunpack.c.h.b16 %v251
    %v857 = vunpack.c.l.b16 %v252
    %v858 = vunpack.c.h.b16 %v252
    %v859 = vunpack.c.l.b16 %v253
    %v860 = vunpack.c.h.b16 %v253
    %v861 = vunpack.c.l.b16 %v254
    %v862 = vunpack.c.h.b16 %v254
    %v863 = vunpack.c.l.b16 %v255
    %v864 = vunpack.c.h.b16 %v255
    %v865 = vpack.c.b16 %v485, %v475
    %v866 = vpack.c.b16 %v486, %v476
    %v867 = vpack.c.b16 %v487, %v477
    %v868 = vpack.c.b16 %v488, %v478
    %v869 = vpack.c.b16 %v489, %v479
    %v870 = vpack.c.b16 %v490, %v480
    %v871 = vpack.c.b16 %v491, %v481
    %v872 = vpack.c.b16 %v492, %v482
    %v873 = vpack.c.b16 %v493, %v483
    %v874 = vpack.c.b16 %v494, %v484
    %v875 = vpack.c.b16 %v505, %v495
    %v876 = vpack.c.b16 %v506, %v496
    %v877 = vpack.c.b16 %v507, %v497
    %v878 = vpack.c.b16 %v508, %v498
    %v879 = vpack.c.b16 %v509, %v499
    %v880 = vpack.c.b16 %v510, %v500
    %v881 = vpack.c.b16 %v511, %v501
    %v882 = vpack.c.b16 %v512, %v502
    %v883 = vpack.c.b16 %v513, %v503
    %v884 = vpack.c.b16 %v514, %v504
    %v885 = vpack.c.b16 %v525, %v515
    %v886 = vpack.c.b16 %v526, %v516
    %v887 = vpack.c.b16 %v527, %v517
    %v888 = vpack.c.b16 %v528, %v518
    %v889 = vpack.c.b16 %v529, %v519
    %v890 = vpack.c.b16 %v530, %v520
    %v891 = vpack.c.b16 %v531, %v521
    %v892 = vpack.c.b16 %v532, %v522
    %v893 = vpack.c.b16 %v533, %v523
    %v894 = vpack.c.b16 %v534, %v524
    %v895 = vpack.c.b16 %v545, %v535
    %v896 = vpack.c.b16 %v546, %v536
    %v897 = vpack.c.b16 %v547, %v537
    %v898 = vpack.c.b16 %v548, %v538
    %v899 = vpack.c.b16 %v549, %v539
    %v900 = vpack.c.b16 %v550, %v540
    %v901 = vpack.c.b16 %v551, %v541
    %v902 = vpack.c.b16 %v552, %v542
    %v903 = vpack.c.b16 %v553, %v543
    %v904 = vpack.c.b16 %v554, %v544
    %v905 = vpack.c.b16 %v565, %v555
    %v906 = vpack.c.b16 %v566, %v556
    %v907 = vpack.c.b16 %v567, %v557
    %v908 = vpack.c.b16 %v568, %v558
    %v909 = vpack.c.b16 %v569, %v559
    %v910 = vpack.c.b16 %v570, %v560
    %v911 = vpack.c.b16 %v571, %v561
    %v912 = vpack.c.b16 %v572, %v562
    %v913 = vpack.c.b16 %v573, %v563
    %v914 = vpack.c.b16 %v574, %v564
    %v915 = vpack.c.b16 %v585, %v575
    %v916 = vpack.c.b16 %v586, %v576
    %v917 = vpack.c.b16 %v587, %v577
    %v918 = vpack.c.b16 %v588, %v578
    %v919 = vpack.c.b16 %v589, %v579
    %v920 = vpack.c.b16 %v590, %v580
    %v921 = vpack.c.b16 %v591, %v581
    %v922 = vpack.c.b16 %v592, %v582
    %v923 = vpack.c.b16 %v593, %v583
    %v924 = vpack.c.b16 %v594, %v584
    %v925 = vpack.c.b16 %v605, %v595
    %v926 = vpack.c.b16 %v606, %v596
    %v927 = vpack.c.b16 %v607, %v597
    %v928 = vpack.c.b16 %v608, %v598
    %v929 = vpack.c.b16 %v609, %v599
    %v930 = vpack.c.b16 %v610, %v600
    %v931 = vpack.c.b16 %v611, %v601
    %v932 = vpack.c.b16 %v612, %v602
    %v933 = vpack.c.b16 %v613, %v603
    %v934 = vpack.c.b16 %v614, %v604
    %v935 = vpack.c.b16 %v625, %v615
    %v936 = vpack.c.b16 %v626, %v616
    %v937 = vpack.c.b16 %v627, %v617
    %v938 = vpack.c.b16 %v628, %v618
    %v939 = vpack.c.b16 %v629, %v619
    %v940 = vpack.c.b16 %v630, %v620
    %v941 = vpack.c.b16 %v631, %v621
    %v942 = vpack.c.b16 %v632, %v622
    %v943 = vpack.c.b16 %v633, %v623
    %v944 = vpack.c.b16 %v634, %v624
    %v945 = vpack.c.b16 %v645, %v635
    %v946 = vpack.c.b16 %v646, %v636
    %v947 = vpack.c.b16 %v647, %v637
    %v948 = vpack.c.b16 %v648, %v638
    %v949 = vpack.c.b16 %v649, %v639
    %v950 = vpack.c.b16 %v650, %v640
    %v951 = vpack.c.b16 %v651, %v641
    %v952 = vpack.c.b16 %v652, %v642
    %v953 = vpack.c.b16 %v653, %v643
    %v954 = vpack.c.b16 %v654, %v644
    %v955 = vpack.c.b16 %v665, %v655
    %v956 = vpack.c.b16 %v666, %v656
    %v957 = vpack.c.b16 %v667, %v657
    %v958 = vpack.c.b16 %v668, %v658
    %v959 = vpack.c.b16 %v669, %v659
    %v960 = vpack.c.b16 %v670, %v660
    %v961 = vpack.c.b16 %v671, %v661
    %v962 = vpack.c.b16 %v672, %v662
    %v963 = vpack.c.b16 %v673, %v663
    %v964 = vpack.c.b16 %v674, %v664
    %v965 = vpack.c.b16 %v685, %v675
    %v966 = vpack.c.b16 %v686, %v676
    %v967 = vpack.c.b16 %v687, %v677
    %v968 = vpack.c.b16 %v688, %v678
    %v969 = vpack.c.b16 %v689, %v679
    %v970 = vpack.c.b16 %v690, %v680
    %v971 = vpack.c.b16 %v691, %v681
    %v972 = vpack.c.b16 %v692, %v682
    %v973 = vpack.c.b16 %v693, %v683
    %v974 = vpack.c.b16 %v694, %v684
    %v975 = vpack.c.b16 %v705, %v695
    %v976 = vpack.c.b16 %v706, %v696
    %v977 = vpack.c.b16 %v707, %v697
    %v978 = vpack.c.b16 %v708, %v698
    %v979 = vpack.c.b16 %v709, %v699
    %v980 = vpack.c.b16 %v710, %v700
    %v981 = vpack.c.b16 %v711, %v701
    %v982 = vpack.c.b16 %v712, %v702
    %v983 = vpack.c.b16 %v713, %v703
    %v984 = vpack.c.b16 %v714, %v704
    %v985 = vpack.c.b16 %v725, %v715
    %v986 = vpack.c.b16 %v726, %v716
    %v987 = vpack.c.b16 %v727, %v717
    %v988 = vpack.c.b16 %v728, %v718
    %v989 = vpack.c.b16 %v729, %v719
    %v990 = vpack.c.b16 %v730, %v720
    %v991 = vpack.c.b16 %v731, %v721
    %v992 = vpack.c.b16 %v732, %v722
    %v993 = vpack.c.b16 %v733, %v723
    %v994 = vpack.c.b16 %v734, %v724
    %v995 = vpack.c.b16 %v745, %v735
    %v996 = vpack.c.b16 %v746, %v736
    %v997 = vpack.c.b16 %v747, %v737
    %v998 = vpack.c.b16 %v748, %v738
    %v999 = vpack.c.b16 %v749, %v739
    %v1000 = vpack.c.b16 %v750, %v740
    %v1001 = vpack.c.b16 %v751, %v741
    %v1002 = vpack.c.b16 %v752, %v742
    %v1003 = vpack.c.b16 %v753, %v743
    %v1004 = vpack.c.b16 %v754, %v744
    %v1005 = vpack.c.b16 %v765, %v755
    %v1006 = vpack.c.b16 %v766, %v756
    %v1007 = vpack.c.b16 %v767, %v757
    %v1008 = vpack.c.b16 %v768, %v758
    %v1009 = vpack.c.b16 %v769, %v759
    %v1010 = vpack.c.b16 %v770, %v760
    %v1011 = vpack.c.b16 %v771, %v761
    %v1012 = vpack.c.b16 %v772, %v762
    %v1013 = vpack.c.b16 %v773, %v763
    %v1014 = vpack.c.b16 %v774, %v764
    %v1015 = vpack.c.b16 %v785, %v775
    %v1016 = vpack.c.b16 %v786, %v776
    %v1017 = vpack.c.b16 %v787, %v777
    %v1018 = vpack.c.b16 %v788, %v778
    %v1019 = vpack.c.b16 %v789, %v779
    %v1020 = vpack.c.b16 %v790, %v780
    %v1021 = vpack.c.b16 %v791, %v781
    %v1022 = vpack.c.b16 %v792, %v782
    %v1023 = vpack.c.b16 %v793, %v783
    %v1024 = vpack.c.b16 %v794, %v784
    %v1025 = vpack.c.b16 %v805, %v795
    %v1026 = vpack.c.b16 %v806, %v796
    %v1027 = vpack.c.b16 %v807, %v797
    %v1028 = vpack.c.b16 %v808, %v798
    %v1029 = vpack.c.b16 %v809, %v799
    %v1030 = vpack.c.b16 %v810, %v800
    %v1031 = vpack.c.b16 %v811, %v801
    %v1032 = vpack.c.b16 %v812, %v802
    %v1033 = vpack.c.b16 %v813, %v803
    %v1034 = vpack.c.b16 %v814, %v804
    %v1035 = vpack.c.b16 %v825, %v815
    %v1036 = vpack.c.b16 %v826, %v816
    %v1037 = vpack.c.b16 %v827, %v817
    %v1038 = vpack.c.b16 %v828, %v818
    %v1039 = vpack.c.b16 %v829, %v819
    %v1040 = vpack.c.b16 %v830, %v820
    %v1041 = vpack.c.b16 %v831, %v821
    %v1042 = vpack.c.b16 %v832, %v822
    %v1043 = vpack.c.b16 %v833, %v823
    %v1044 = vpack.c.b16 %v834, %v824
    %v1045 = vpack.c.b16 %v845, %v835
    %v1046 = vpack.c.b16 %v846, %v836
    %v1047 = vpack.c.b16 %v847, %v837
    %v1048 = vpack.c.b16 %v848, %v838
    %v1049 = vpack.c.b16 %v849, %v839
    %v1050 = vpack.c.b16 %v850, %v840
    %v1051 = vpack.c.b16 %v851, %v841
    %v1052 = vpack.c.b16 %v852, %v842
    %v1053 = vpack.c.b16 %v853, %v843
    %v1054 = vpack.c.b16 %v854, %v844
    %v1055 = vpack.c.b16 %v855, %v855
    %v1056 = vpack.c.b16 %v856, %v856
    %v1057 = vpack.c.b16 %v857, %v857
    %v1058 = vpack.c.b16 %v858, %v858
    %v1059 = vpack.c.b16 %v859, %v859
    %v1060 = vpack.c.b16 %v860, %v860
    %v1061 = vpack.c.b16 %v861, %v861
    %v1062 = vpack.c.b16 %v862, %v862
    %v1063 = vpack.c.b16 %v863, %v863
    %v1064 = vpack.c.b16 %v864, %v864
    %v1246 = vperm.slane %v256, 0
    %v1247 = vperm.slane %v256, 1
    %v1248 = vperm.slane %v256, 2
    %vm1252 = vcmask 654336
    %v1253 = vsel %vm1252, %v270, 0
    %v1256 = vsel %vm1252, %v874, 0
    %v1259 = vsel %vm1252, %v884, 0
    %v1262 = vsel %vm1252, %v894, 0
    %v1265 = vsel %vm1252, %v904, 0
    %v1268 = vsel %vm1252, %v914, 0
    %v1271 = vsel %vm1252, %v924, 0
    %v1274 = vsel %vm1252, %v934, 0
    %v1277 = vsel %vm1252, %v944, 0
    %v1280 = vsel %vm1252, %v954, 0
    %v1283 = vsel %vm1252, %v964, 0
    %v1286 = vsel %vm1252, %v974, 0
    %v1289 = vsel %vm1252, %v984, 0
    %v1292 = vsel %vm1252, %v994, 0
    %v1295 = vsel %vm1252, %v1004, 0
    %v1298 = vsel %vm1252, %v1014, 0
    %v1301 = vsel %vm1252, %v1024, 0
    %v1304 = vsel %vm1252, %v1034, 0
    %v1307 = vsel %vm1252, %v1044, 0
    %v1310 = vsel %vm1252, %v1054, 0
    %v1313 = vsel %vm1252, %v1064, 0
    %1315 = vmatpush.bf16.xpose.msra.mxu0 %v935
    %1316 = vmatpush.bf16.xpose.msra.mxu0 %v925
    %1317 = vmatpush.bf16.xpose.msra.mxu0 %v915
    %1318 = vmatpush.bf16.xpose.msra.mxu0 %v905
    %1319 = vmatpush.bf16.xpose.msra.mxu0 %v895
    %1320 = vmatpush.bf16.xpose.msra.mxu0 %v885
    %1321 = vmatpush.bf16.xpose.msra.mxu0 %v875
    %1322 = vmatpush.bf16.xpose.msra.mxu0 %v865
    %1323 = vmatmul.bf16.gmra.mxu0 %v259
    %v1324 = vpop.f32.mrf.mxu0
    %v1325 = vadd.f32 %v1246, %v1324
    %v1326 = vpop.f32.mrf.mxu0
    %1327 = vdwg.mxu0
    %1328 = vmatpush.bf16.xpose.msra.mxu0 %v936
    %1329 = vmatpush.bf16.xpose.msra.mxu0 %v926
    %1330 = vmatpush.bf16.xpose.msra.mxu0 %v916
    %1331 = vmatpush.bf16.xpose.msra.mxu0 %v906
    %1332 = vmatpush.bf16.xpose.msra.mxu0 %v896
    %1333 = vmatpush.bf16.xpose.msra.mxu0 %v886
    %1334 = vmatpush.bf16.xpose.msra.mxu0 %v876
    %1335 = vmatpush.bf16.xpose.msra.mxu0 %v866
    %1336 = vmatmul.bf16.gmra.mxu0 %v260
    %v1337 = vpop.f32.mrf.mxu0
    %v1338 = vadd.f32 %v1325, %v1337
    %v1339 = vpop.f32.mrf.mxu0
    %1340 = vdwg.mxu0
    %1341 = vmatpush.bf16.xpose.msra.mxu0 %v937
    %1342 = vmatpush.bf16.xpose.msra.mxu0 %v927
    %1343 = vmatpush.bf16.xpose.msra.mxu0 %v917
    %1344 = vmatpush.bf16.xpose.msra.mxu0 %v907
    %1345 = vmatpush.bf16.xpose.msra.mxu0 %v897
    %1346 = vmatpush.bf16.xpose.msra.mxu0 %v887
    %1347 = vmatpush.bf16.xpose.msra.mxu0 %v877
    %1348 = vmatpush.bf16.xpose.msra.mxu0 %v867
    %1349 = vmatmul.bf16.gmra.mxu0 %v261
    %v1350 = vpop.f32.mrf.mxu0
    %v1351 = vadd.f32 %v1338, %v1350
    %v1352 = vpop.f32.mrf.mxu0
    %1353 = vdwg.mxu0
    %1354 = vmatpush.bf16.xpose.msra.mxu0 %v938
    %1355 = vmatpush.bf16.xpose.msra.mxu0 %v928
    %1356 = vmatpush.bf16.xpose.msra.mxu0 %v918
    %1357 = vmatpush.bf16.xpose.msra.mxu0 %v908
    %1358 = vmatpush.bf16.xpose.msra.mxu0 %v898
    %1359 = vmatpush.bf16.xpose.msra.mxu0 %v888
    %1360 = vmatpush.bf16.xpose.msra.mxu0 %v878
    %1361 = vmatpush.bf16.xpose.msra.mxu0 %v868
    %1362 = vmatmul.bf16.gmra.mxu0 %v262
    %v1363 = vpop.f32.mrf.mxu0
    %v1364 = vadd.f32 %v1351, %v1363
    %v1365 = vpop.f32.mrf.mxu0
    %1366 = vdwg.mxu0
    %1367 = vmatpush.bf16.xpose.msra.mxu0 %v939
    %1368 = vmatpush.bf16.xpose.msra.mxu0 %v929
    %1369 = vmatpush.bf16.xpose.msra.mxu0 %v919
    %1370 = vmatpush.bf16.xpose.msra.mxu0 %v909
    %1371 = vmatpush.bf16.xpose.msra.mxu0 %v899
    %1372 = vmatpush.bf16.xpose.msra.mxu0 %v889
    %1373 = vmatpush.bf16.xpose.msra.mxu0 %v879
    %1374 = vmatpush.bf16.xpose.msra.mxu0 %v869
    %1375 = vmatmul.bf16.gmra.mxu0 %v263
    %v1376 = vpop.f32.mrf.mxu0
    %v1377 = vadd.f32 %v1364, %v1376
    %v1378 = vpop.f32.mrf.mxu0
    %1379 = vdwg.mxu0
    %1380 = vmatpush.bf16.xpose.msra.mxu0 %v940
    %1381 = vmatpush.bf16.xpose.msra.mxu0 %v930
    %1382 = vmatpush.bf16.xpose.msra.mxu0 %v920
    %1383 = vmatpush.bf16.xpose.msra.mxu0 %v910
    %1384 = vmatpush.bf16.xpose.msra.mxu0 %v900
    %1385 = vmatpush.bf16.xpose.msra.mxu0 %v890
    %1386 = vmatpush.bf16.xpose.msra.mxu0 %v880
    %1387 = vmatpush.bf16.xpose.msra.mxu0 %v870
    %1388 = vmatmul.bf16.gmra.mxu0 %v264
    %v1389 = vpop.f32.mrf.mxu0
    %v1390 = vadd.f32 %v1377, %v1389
    %v1391 = vpop.f32.mrf.mxu0
    %1392 = vdwg.mxu0
    %1393 = vmatpush.bf16.xpose.msra.mxu0 %v941
    %1394 = vmatpush.bf16.xpose.msra.mxu0 %v931
    %1395 = vmatpush.bf16.xpose.msra.mxu0 %v921
    %1396 = vmatpush.bf16.xpose.msra.mxu0 %v911
    %1397 = vmatpush.bf16.xpose.msra.mxu0 %v901
    %1398 = vmatpush.bf16.xpose.msra.mxu0 %v891
    %1399 = vmatpush.bf16.xpose.msra.mxu0 %v881
    %1400 = vmatpush.bf16.xpose.msra.mxu0 %v871
    %1401 = vmatmul.bf16.gmra.mxu0 %v265
    %v1402 = vpop.f32.mrf.mxu0
    %v1403 = vadd.f32 %v1390, %v1402
    %v1404 = vpop.f32.mrf.mxu0
    %1405 = vdwg.mxu0
    %1406 = vmatpush.bf16.xpose.msra.mxu0 %v942
    %1407 = vmatpush.bf16.xpose.msra.mxu0 %v932
    %1408 = vmatpush.bf16.xpose.msra.mxu0 %v922
    %1409 = vmatpush.bf16.xpose.msra.mxu0 %v912
    %1410 = vmatpush.bf16.xpose.msra.mxu0 %v902
    %1411 = vmatpush.bf16.xpose.msra.mxu0 %v892
    %1412 = vmatpush.bf16.xpose.msra.mxu0 %v882
    %1413 = vmatpush.bf16.xpose.msra.mxu0 %v872
    %1414 = vmatmul.bf16.gmra.mxu0 %v266
    %v1415 = vpop.f32.mrf.mxu0
    %v1416 = vadd.f32 %v1403, %v1415
    %v1417 = vpop.f32.mrf.mxu0
    %1418 = vdwg.mxu0
    %1419 = vmatpush.bf16.xpose.msra.mxu0 %v943
    %1420 = vmatpush.bf16.xpose.msra.mxu0 %v933
    %1421 = vmatpush.bf16.xpose.msra.mxu0 %v923
    %1422 = vmatpush.bf16.xpose.msra.mxu0 %v913
    %1423 = vmatpush.bf16.xpose.msra.mxu0 %v903
    %1424 = vmatpush.bf16.xpose.msra.mxu0 %v893
    %1425 = vmatpush.bf16.xpose.msra.mxu0 %v883
    %1426 = vmatpush.bf16.xpose.msra.mxu0 %v873
    %1427 = vmatmul.bf16.gmra.mxu0 %v269
    %v1428 = vpop.f32.mrf.mxu0
    %v1429 = vadd.f32 %v1416, %v1428
    %v1430 = vpop.f32.mrf.mxu0
    %1431 = vdwg.mxu0
    %1432 = vmatpush.bf16.xpose.msra.mxu0 %v1277
    %1433 = vmatpush.bf16.xpose.msra.mxu0 %v1274
    %1434 = vmatpush.bf16.xpose.msra.mxu0 %v1271
    %1435 = vmatpush.bf16.xpose.msra.mxu0 %v1268
    %1436 = vmatpush.bf16.xpose.msra.mxu0 %v1265
    %1437 = vmatpush.bf16.xpose.msra.mxu0 %v1262
    %1438 = vmatpush.bf16.xpose.msra.mxu0 %v1259
    %1439 = vmatpush.bf16.xpose.msra.mxu0 %v1256
    %1440 = vmatmul.bf16.gmra.mxu0 %v1253
    %v1441 = vpop.f32.mrf.mxu0
    %v1442 = vadd.f32 %v1429, %v1441
    %v1443 = vpop.f32.mrf.mxu0
    %1444 = vdwg.mxu0
    %1445 = vmatpush.bf16.xpose.msra.mxu0 %v1015
    %1446 = vmatpush.bf16.xpose.msra.mxu0 %v1005
    %1447 = vmatpush.bf16.xpose.msra.mxu0 %v995
    %1448 = vmatpush.bf16.xpose.msra.mxu0 %v985
    %1449 = vmatpush.bf16.xpose.msra.mxu0 %v975
    %1450 = vmatpush.bf16.xpose.msra.mxu0 %v965
    %1451 = vmatpush.bf16.xpose.msra.mxu0 %v955
    %1452 = vmatpush.bf16.xpose.msra.mxu0 %v945
    %1453 = vmatmul.bf16.gmra.mxu0 %v259
    %v1454 = vpop.f32.mrf.mxu0
    %v1455 = vadd.f32 %v1247, %v1454
    %v1456 = vpop.f32.mrf.mxu0
    %1457 = vdwg.mxu0
    %1458 = vmatpush.bf16.xpose.msra.mxu0 %v1016
    %1459 = vmatpush.bf16.xpose.msra.mxu0 %v1006
    %1460 = vmatpush.bf16.xpose.msra.mxu0 %v996
    %1461 = vmatpush.bf16.xpose.msra.mxu0 %v986
    %1462 = vmatpush.bf16.xpose.msra.mxu0 %v976
    %1463 = vmatpush.bf16.xpose.msra.mxu0 %v966
    %1464 = vmatpush.bf16.xpose.msra.mxu0 %v956
    %1465 = vmatpush.bf16.xpose.msra.mxu0 %v946
    %1466 = vmatmul.bf16.gmra.mxu0 %v260
    %v1467 = vpop.f32.mrf.mxu0
    %v1468 = vadd.f32 %v1455, %v1467
    %v1469 = vpop.f32.mrf.mxu0
    %1470 = vdwg.mxu0
    %1471 = vmatpush.bf16.xpose.msra.mxu0 %v1017
    %1472 = vmatpush.bf16.xpose.msra.mxu0 %v1007
    %1473 = vmatpush.bf16.xpose.msra.mxu0 %v997
    %1474 = vmatpush.bf16.xpose.msra.mxu0 %v987
    %1475 = vmatpush.bf16.xpose.msra.mxu0 %v977
    %1476 = vmatpush.bf16.xpose.msra.mxu0 %v967
    %1477 = vmatpush.bf16.xpose.msra.mxu0 %v957
    %1478 = vmatpush.bf16.xpose.msra.mxu0 %v947
    %1479 = vmatmul.bf16.gmra.mxu0 %v261
    %v1480 = vpop.f32.mrf.mxu0
    %v1481 = vadd.f32 %v1468, %v1480
    %v1482 = vpop.f32.mrf.mxu0
    %1483 = vdwg.mxu0
    %1484 = vmatpush.bf16.xpose.msra.mxu0 %v1018
    %1485 = vmatpush.bf16.xpose.msra.mxu0 %v1008
    %1486 = vmatpush.bf16.xpose.msra.mxu0 %v998
    %1487 = vmatpush.bf16.xpose.msra.mxu0 %v988
    %1488 = vmatpush.bf16.xpose.msra.mxu0 %v978
    %1489 = vmatpush.bf16.xpose.msra.mxu0 %v968
    %1490 = vmatpush.bf16.xpose.msra.mxu0 %v958
    %1491 = vmatpush.bf16.xpose.msra.mxu0 %v948
    %1492 = vmatmul.bf16.gmra.mxu0 %v262
    %v1493 = vpop.f32.mrf.mxu0
    %v1494 = vadd.f32 %v1481, %v1493
    %v1495 = vpop.f32.mrf.mxu0
    %1496 = vdwg.mxu0
    %1497 = vmatpush.bf16.xpose.msra.mxu0 %v1019
    %1498 = vmatpush.bf16.xpose.msra.mxu0 %v1009
    %1499 = vmatpush.bf16.xpose.msra.mxu0 %v999
    %1500 = vmatpush.bf16.xpose.msra.mxu0 %v989
    %1501 = vmatpush.bf16.xpose.msra.mxu0 %v979
    %1502 = vmatpush.bf16.xpose.msra.mxu0 %v969
    %1503 = vmatpush.bf16.xpose.msra.mxu0 %v959
    %1504 = vmatpush.bf16.xpose.msra.mxu0 %v949
    %1505 = vmatmul.bf16.gmra.mxu0 %v263
    %v1506 = vpop.f32.mrf.mxu0
    %v1507 = vadd.f32 %v1494, %v1506
    %v1508 = vpop.f32.mrf.mxu0
    %1509 = vdwg.mxu0
    %1510 = vmatpush.bf16.xpose.msra.mxu0 %v1020
    %1511 = vmatpush.bf16.xpose.msra.mxu0 %v1010
    %1512 = vmatpush.bf16.xpose.msra.mxu0 %v1000
    %1513 = vmatpush.bf16.xpose.msra.mxu0 %v990
    %1514 = vmatpush.bf16.xpose.msra.mxu0 %v980
    %1515 = vmatpush.bf16.xpose.msra.mxu0 %v970
    %1516 = vmatpush.bf16.xpose.msra.mxu0 %v960
    %1517 = vmatpush.bf16.xpose.msra.mxu0 %v950
    %1518 = vmatmul.bf16.gmra.mxu0 %v264
    %v1519 = vpop.f32.mrf.mxu0
    %v1520 = vadd.f32 %v1507, %v1519
    %v1521 = vpop.f32.mrf.mxu0
    %1522 = vdwg.mxu0
    %1523 = vmatpush.bf16.xpose.msra.mxu0 %v1021
    %1524 = vmatpush.bf16.xpose.msra.mxu0 %v1011
    %1525 = vmatpush.bf16.xpose.msra.mxu0 %v1001
    %1526 = vmatpush.bf16.xpose.msra.mxu0 %v991
    %1527 = vmatpush.bf16.xpose.msra.mxu0 %v981
    %1528 = vmatpush.bf16.xpose.msra.mxu0 %v971
    %1529 = vmatpush.bf16.xpose.msra.mxu0 %v961
    %1530 = vmatpush.bf16.xpose.msra.mxu0 %v951
    %1531 = vmatmul.bf16.gmra.mxu0 %v265
    %v1532 = vpop.f32.mrf.mxu0
    %v1533 = vadd.f32 %v1520, %v1532
    %v1534 = vpop.f32.mrf.mxu0
    %1535 = vdwg.mxu0
    %1536 = vmatpush.bf16.xpose.msra.mxu0 %v1022
    %1537 = vmatpush.bf16.xpose.msra.mxu0 %v1012
    %1538 = vmatpush.bf16.xpose.msra.mxu0 %v1002
    %1539 = vmatpush.bf16.xpose.msra.mxu0 %v992
    %1540 = vmatpush.bf16.xpose.msra.mxu0 %v982
    %1541 = vmatpush.bf16.xpose.msra.mxu0 %v972
    %1542 = vmatpush.bf16.xpose.msra.mxu0 %v962
    %1543 = vmatpush.bf16.xpose.msra.mxu0 %v952
    %1544 = vmatmul.bf16.gmra.mxu0 %v266
    %v1545 = vpop.f32.mrf.mxu0
    %v1546 = vadd.f32 %v1533, %v1545
    %v1547 = vpop.f32.mrf.mxu0
    %1548 = vdwg.mxu0
    %1549 = vmatpush.bf16.xpose.msra.mxu0 %v1023
    %1550 = vmatpush.bf16.xpose.msra.mxu0 %v1013
    %1551 = vmatpush.bf16.xpose.msra.mxu0 %v1003
    %1552 = vmatpush.bf16.xpose.msra.mxu0 %v993
    %1553 = vmatpush.bf16.xpose.msra.mxu0 %v983
    %1554 = vmatpush.bf16.xpose.msra.mxu0 %v973
    %1555 = vmatpush.bf16.xpose.msra.mxu0 %v963
    %1556 = vmatpush.bf16.xpose.msra.mxu0 %v953
    %1557 = vmatmul.bf16.gmra.mxu0 %v269
    %v1558 = vpop.f32.mrf.mxu0
    %v1559 = vadd.f32 %v1546, %v1558
    %v1560 = vpop.f32.mrf.mxu0
    %1561 = vdwg.mxu0
    %1562 = vmatpush.bf16.xpose.msra.mxu0 %v1301
    %1563 = vmatpush.bf16.xpose.msra.mxu0 %v1298
    %1564 = vmatpush.bf16.xpose.msra.mxu0 %v1295
    %1565 = vmatpush.bf16.xpose.msra.mxu0 %v1292
    %1566 = vmatpush.bf16.xpose.msra.mxu0 %v1289
    %1567 = vmatpush.bf16.xpose.msra.mxu0 %v1286
    %1568 = vmatpush.bf16.xpose.msra.mxu0 %v1283
    %1569 = vmatpush.bf16.xpose.msra.mxu0 %v1280
    %1570 = vmatmul.bf16.gmra.mxu0 %v1253
    %v1571 = vpop.f32.mrf.mxu0
    %v1572 = vadd.f32 %v1559, %v1571
    %v1573 = vpop.f32.mrf.mxu0
    %1574 = vdwg.mxu0
    %1575 = vmatpush.bf16.xpose.msra.mxu0 0
    %1576 = vmatpush.bf16.xpose.msra.mxu0 0
    %1577 = vmatpush.bf16.xpose.msra.mxu0 0
    %1578 = vmatpush.bf16.xpose.msra.mxu0 0
    %1579 = vmatpush.bf16.xpose.msra.mxu0 %v1055
    %1580 = vmatpush.bf16.xpose.msra.mxu0 %v1045
    %1581 = vmatpush.bf16.xpose.msra.mxu0 %v1035
    %1582 = vmatpush.bf16.xpose.msra.mxu0 %v1025
    %1583 = vmatmul.bf16.gmra.mxu0 %v259
    %v1584 = vpop.f32.mrf.mxu0
    %v1585 = vadd.f32 %v1248, %v1584
    %v1586 = vpop.f32.mrf.mxu0
    %1587 = vdwg.mxu0
    %1588 = vmatpush.bf16.xpose.msra.mxu0 0
    %1589 = vmatpush.bf16.xpose.msra.mxu0 0
    %1590 = vmatpush.bf16.xpose.msra.mxu0 0
    %1591 = vmatpush.bf16.xpose.msra.mxu0 0
    %1592 = vmatpush.bf16.xpose.msra.mxu0 %v1056
    %1593 = vmatpush.bf16.xpose.msra.mxu0 %v1046
    %1594 = vmatpush.bf16.xpose.msra.mxu0 %v1036
    %1595 = vmatpush.bf16.xpose.msra.mxu0 %v1026
    %1596 = vmatmul.bf16.gmra.mxu0 %v260
    %v1597 = vpop.f32.mrf.mxu0
    %v1598 = vadd.f32 %v1585, %v1597
    %v1599 = vpop.f32.mrf.mxu0
    %1600 = vdwg.mxu0
    %1601 = vmatpush.bf16.xpose.msra.mxu0 0
    %1602 = vmatpush.bf16.xpose.msra.mxu0 0
    %1603 = vmatpush.bf16.xpose.msra.mxu0 0
    %1604 = vmatpush.bf16.xpose.msra.mxu0 0
    %1605 = vmatpush.bf16.xpose.msra.mxu0 %v1057
    %1606 = vmatpush.bf16.xpose.msra.mxu0 %v1047
    %1607 = vmatpush.bf16.xpose.msra.mxu0 %v1037
    %1608 = vmatpush.bf16.xpose.msra.mxu0 %v1027
    %1609 = vmatmul.bf16.gmra.mxu0 %v261
    %v1610 = vpop.f32.mrf.mxu0
    %v1611 = vadd.f32 %v1598, %v1610
    %v1612 = vpop.f32.mrf.mxu0
    %1613 = vdwg.mxu0
    %1614 = vmatpush.bf16.xpose.msra.mxu0 0
    %1615 = vmatpush.bf16.xpose.msra.mxu0 0
    %1616 = vmatpush.bf16.xpose.msra.mxu0 0
    %1617 = vmatpush.bf16.xpose.msra.mxu0 0
    %1618 = vmatpush.bf16.xpose.msra.mxu0 %v1058
    %1619 = vmatpush.bf16.xpose.msra.mxu0 %v1048
    %1620 = vmatpush.bf16.xpose.msra.mxu0 %v1038
    %1621 = vmatpush.bf16.xpose.msra.mxu0 %v1028
    %1622 = vmatmul.bf16.gmra.mxu0 %v262
    %v1623 = vpop.f32.mrf.mxu0
    %v1624 = vadd.f32 %v1611, %v1623
    %v1625 = vpop.f32.mrf.mxu0
    %1626 = vdwg.mxu0
    %1627 = vmatpush.bf16.xpose.msra.mxu0 0
    %1628 = vmatpush.bf16.xpose.msra.mxu0 0
    %1629 = vmatpush.bf16.xpose.msra.mxu0 0
    %1630 = vmatpush.bf16.xpose.msra.mxu0 0
    %1631 = vmatpush.bf16.xpose.msra.mxu0 %v1059
    %1632 = vmatpush.bf16.xpose.msra.mxu0 %v1049
    %1633 = vmatpush.bf16.xpose.msra.mxu0 %v1039
    %1634 = vmatpush.bf16.xpose.msra.mxu0 %v1029
    %1635 = vmatmul.bf16.gmra.mxu0 %v263
    %v1636 = vpop.f32.mrf.mxu0
    %v1637 = vadd.f32 %v1624, %v1636
    %v1638 = vpop.f32.mrf.mxu0
    %1639 = vdwg.mxu0
    %1640 = vmatpush.bf16.xpose.msra.mxu0 0
    %1641 = vmatpush.bf16.xpose.msra.mxu0 0
    %1642 = vmatpush.bf16.xpose.msra.mxu0 0
    %1643 = vmatpush.bf16.xpose.msra.mxu0 0
    %1644 = vmatpush.bf16.xpose.msra.mxu0 %v1060
    %1645 = vmatpush.bf16.xpose.msra.mxu0 %v1050
    %1646 = vmatpush.bf16.xpose.msra.mxu0 %v1040
    %1647 = vmatpush.bf16.xpose.msra.mxu0 %v1030
    %1648 = vmatmul.bf16.gmra.mxu0 %v264
    %v1649 = vpop.f32.mrf.mxu0
    %v1650 = vadd.f32 %v1637, %v1649
    %v1651 = vpop.f32.mrf.mxu0
    %1652 = vdwg.mxu0
    %1653 = vmatpush.bf16.xpose.msra.mxu0 0
    %1654 = vmatpush.bf16.xpose.msra.mxu0 0
    %1655 = vmatpush.bf16.xpose.msra.mxu0 0
    %1656 = vmatpush.bf16.xpose.msra.mxu0 0
    %1657 = vmatpush.bf16.xpose.msra.mxu0 %v1061
    %1658 = vmatpush.bf16.xpose.msra.mxu0 %v1051
    %1659 = vmatpush.bf16.xpose.msra.mxu0 %v1041
    %1660 = vmatpush.bf16.xpose.msra.mxu0 %v1031
    %1661 = vmatmul.bf16.gmra.mxu0 %v265
    %v1662 = vpop.f32.mrf.mxu0
    %v1663 = vadd.f32 %v1650, %v1662
    %v1664 = vpop.f32.mrf.mxu0
    %1665 = vdwg.mxu0
    %1666 = vmatpush.bf16.xpose.msra.mxu0 0
    %1667 = vmatpush.bf16.xpose.msra.mxu0 0
    %1668 = vmatpush.bf16.xpose.msra.mxu0 0
    %1669 = vmatpush.bf16.xpose.msra.mxu0 0
    %1670 = vmatpush.bf16.xpose.msra.mxu0 %v1062
    %1671 = vmatpush.bf16.xpose.msra.mxu0 %v1052
    %1672 = vmatpush.bf16.xpose.msra.mxu0 %v1042
    %1673 = vmatpush.bf16.xpose.msra.mxu0 %v1032
    %1674 = vmatmul.bf16.gmra.mxu0 %v266
    %v1675 = vpop.f32.mrf.mxu0
    %v1676 = vadd.f32 %v1663, %v1675
    %v1677 = vpop.f32.mrf.mxu0
    %1678 = vdwg.mxu0
    %1679 = vmatpush.bf16.xpose.msra.mxu0 0
    %1680 = vmatpush.bf16.xpose.msra.mxu0 0
    %1681 = vmatpush.bf16.xpose.msra.mxu0 0
    %1682 = vmatpush.bf16.xpose.msra.mxu0 0
    %1683 = vmatpush.bf16.xpose.msra.mxu0 %v1063
    %1684 = vmatpush.bf16.xpose.msra.mxu0 %v1053
    %1685 = vmatpush.bf16.xpose.msra.mxu0 %v1043
    %1686 = vmatpush.bf16.xpose.msra.mxu0 %v1033
    %1687 = vmatmul.bf16.gmra.mxu0 %v269
    %v1688 = vpop.f32.mrf.mxu0
    %v1689 = vadd.f32 %v1676, %v1688
    %v1690 = vpop.f32.mrf.mxu0
    %1691 = vdwg.mxu0
    %1692 = vmatpush.bf16.xpose.msra.mxu0 0
    %1693 = vmatpush.bf16.xpose.msra.mxu0 0
    %1694 = vmatpush.bf16.xpose.msra.mxu0 0
    %1695 = vmatpush.bf16.xpose.msra.mxu0 0
    %1696 = vmatpush.bf16.xpose.msra.mxu0 %v1313
    %1697 = vmatpush.bf16.xpose.msra.mxu0 %v1310
    %1698 = vmatpush.bf16.xpose.msra.mxu0 %v1307
    %1699 = vmatpush.bf16.xpose.msra.mxu0 %v1304
    %1700 = vmatmul.bf16.gmra.mxu0 %v1253
    %v1701 = vpop.f32.mrf.mxu0
    %v1702 = vadd.f32 %v1689, %v1701
    %v1703 = vpop.f32.mrf.mxu0
    %1704 = vdwg.mxu0
    %v1705 = vmax.f32 %v1442, 0.0
    %v1706 = vmax.f32 %v1572, 0.0
    %v1707 = vmax.f32 %v1702, 0.0
    %v1711 = vrot.slane %v1706, 7
    %v1712 = vrot.slane %v1707, 6
    %vm1713 = vcmask 1040384
    %v1714 = vsel %vm1713, %v1705, %v1711
    %vm1715 = vcmask 1041408
    %v1716 = vsel %vm1715, %v1714, %v1712
    %v1718 = vlaneseq
    %vm1719 = vcmp.ge.s32.totalorder %v1718, 0
    %vm1720 = vcmp.lt.s32.totalorder %v1718, 308
    %vm1721 = vmand %vm1719, %vm1720
    %1722 = vst.msk [vmem:[#allocation8] sm:$0x7] %vm1721, %v1716
    // Predicated region
    $region26: #{tpu_custom_call.1} parent=1 // pred_check
      _
    $region27: #{tpu_custom_call.1} parent=1 // pred_check_branch
      %1724 = sbr.rel (0) target = $region29
    $region28: #{tpu_custom_call.1} parent=1 // pred_region
      %1726 = vsyncadd [#allocation4], 0
      %s1728 = sshll.u32 [#allocation8], 4
      %s1729 = int_to_ptr.vmem [resolvable:$true] %s1728
      %s1730 = sshll.u32 %s3, 4
      %s1731 = int_to_ptr.hbm [resolvable:$true] %s1730
      %1733 = dma.vmem_to_hbm [thread:$0]  %s1729, 48, %s1731, [#allocation4]
    $region29: #{tpu_custom_call.1} parent=1 // pred_fallthru
      _
    // Predicated region
    $region30: #{tpu_custom_call.1} parent=1 // pred_check
      _
    $region31: #{tpu_custom_call.1} parent=1 // pred_check_branch
      %1735 = sbr.rel (0) target = $region33
    $region32: #{tpu_custom_call.1} parent=1 // pred_region
      %1737 = dma.done [#allocation4], 48
    $region33: #{tpu_custom_call.1} parent=1 // pred_fallthru
      _
    %1738 = vsyncpa [#allocation3], 1
    %1739 = vsyncpa [#allocation6], 1
    %1740 = vsyncpa [#allocation4], 1

</llo_original>
